<compile_context>
chip_gen: v6e
topology: v6e:2x2x1
jax: 0.10.0
libtpu: 0.0.40
codegen_flags: <defaults>
</compile_context>

<pallas_src>
import functools

import jax
import jax.numpy as jnp
from jax.experimental import pallas as pl
from jax.experimental.pallas import tpu as pltpu


def _round_up(x, m):
    return ((x + m - 1) // m) * m


# -----------------------------------------------------------------------------
# Pallas kernel: action histogram -> (hist @ relu_table)/count -> classifier
# -> softmax cross-entropy loss + top1 accuracy (per-tile partial sums).
# -----------------------------------------------------------------------------
def _demo2predicate_kernel(
    actions_ref,      # (B_TILE*T_PAD, 1) int32 action ids (invalid t -> sentinel id)
    goal_ref,         # (B_TILE, 1)       int32 goal ids (padded batch rows -> -1)
    relu_table_ref,   # (A_PAD, H_PAD)    bf16 relu(table @ W_enc + b_enc), 0 for pads
    w_cls_ref,        # (H_PAD, P_PAD)    bf16 classifier weight
    b_cls_ref,        # (1, P_PAD)        f32  classifier bias
    logits_ref,       # out (B_TILE, P_PAD) f32 logits (lane-dense)
    stats_ref,        # out (1, 8, 128)     f32 row0=sum(nll), row1=sum(correct)
    *, num_actions, P, T_PAD, B_TILE,
):
    A_PAD = relu_table_ref.shape[0]
    P_PAD = w_cls_ref.shape[1]
    BT = B_TILE * T_PAD

    # ---- one-hot over action ids ({0,1}) — single cast over the BT-sized array ----
    act = actions_ref[...]                                            # (BT, 1) i32
    a_col = jax.lax.broadcasted_iota(jnp.int32, (BT, A_PAD), 1)
    onehot = (a_col == act).astype(jnp.float32)                       # (BT, A_PAD)

    # ---- action histogram: sublane group-reduce over T_PAD (multiple of 8) --------
    hist = jnp.sum(onehot.reshape(B_TILE, T_PAD, A_PAD), axis=1)      # (B_TILE, A_PAD)

    # valid-timestep count per sample = histogram mass over real action ids
    # (sentinel / pad columns excluded); zero-length rows -> zero embedding.
    col = jax.lax.broadcasted_iota(jnp.int32, (B_TILE, A_PAD), 1)
    cnt = jnp.sum(jnp.where(col < num_actions, hist, 0.0),
                  axis=-1, keepdims=True)                             # (B_TILE, 1)
    inv_cnt = pl.reciprocal(jnp.maximum(cnt, 1.0), approx=False)

    # ---- collapsed encoder + avg pool: single MXU matmul, f32 accumulation --------
    # hist is integer valued -> exact in bf16; sentinel/pad rows of relu_table are 0.
    emb = jnp.dot(hist.astype(jnp.bfloat16), relu_table_ref[...],
                  preferred_element_type=jnp.float32) * inv_cnt       # (B_TILE, H_PAD)

    # ---- PredicateClassifier: Linear -> logits ------------------------------------
    logits = jnp.dot(emb.astype(jnp.bfloat16), w_cls_ref[...],
                     preferred_element_type=jnp.float32) + b_cls_ref[...]
    logits_ref[...] = logits                                          # lane-dense vst

    # mask padded predicate columns before softmax / argmax
    p_col = jax.lax.broadcasted_iota(jnp.int32, (B_TILE, P_PAD), 1)
    lgt = jnp.where(p_col < P, logits, jnp.float32(-1e30))

    # numerically-stable log-softmax + NLL(goal); padded batch rows (goal=-1)
    # contribute 0 to both partial sums.
    m = jnp.max(lgt, axis=-1, keepdims=True)
    z = jnp.exp(lgt - m)
    lse = jnp.log(jnp.sum(z, axis=-1, keepdims=True)) + m
    logp = lgt - lse
    y1h = (p_col == goal_ref[...]).astype(jnp.float32)                # (B_TILE, P_PAD)
    nll = -jnp.sum(y1h * logp, axis=-1, keepdims=True)                # (B_TILE, 1)

    # top1 correctness.  Tie-break differs from torch.argmax only on exact ties.
    is_max = (lgt >= m).astype(jnp.float32)
    correct = jnp.minimum(jnp.sum(y1h * is_max, axis=-1, keepdims=True), 1.0)

    # per-tile partial sums, written as one full (8,128) tile (no masked stores)
    nll_sum = jnp.sum(nll, axis=0, keepdims=True)                     # (1, 1)
    cor_sum = jnp.sum(correct, axis=0, keepdims=True)                 # (1, 1)
    r_iota = jax.lax.broadcasted_iota(jnp.int32, (8, 128), 0)
    stats_ref[0] = jnp.where(r_iota == 0, nll_sum,
                             jnp.where(r_iota == 1, cor_sum, 0.0))


def _run_kernel(actions_flat, goal, relu_table, w_cls, b_cls, *,
                B_TILE, T_PAD, G, num_actions, P):
    A_PAD, H_PAD = relu_table.shape
    P_PAD = w_cls.shape[1]
    BT_TILE = B_TILE * T_PAD
    B_PAD = G * B_TILE

    kernel = functools.partial(_demo2predicate_kernel, num_actions=num_actions,
                               P=P, T_PAD=T_PAD, B_TILE=B_TILE)

    in_specs = [
        pl.BlockSpec((BT_TILE, 1), lambda i: (i, 0)),      # actions (streamed)
        pl.BlockSpec((B_TILE, 1), lambda i: (i, 0)),       # goals   (streamed)
        pl.BlockSpec((A_PAD, H_PAD), lambda i: (0, 0)),    # relu_table (resident)
        pl.BlockSpec((H_PAD, P_PAD), lambda i: (0, 0)),    # w_cls      (resident)
        pl.BlockSpec((1, P_PAD), lambda i: (0, 0)),        # b_cls      (resident)
    ]
    out_specs = (
        pl.BlockSpec((B_TILE, P_PAD), lambda i: (i, 0)),   # logits (lane-dense)
        pl.BlockSpec((1, 8, 128), lambda i: (i, 0, 0)),    # per-tile stats
    )
    out_shape = (
        jax.ShapeDtypeStruct((B_PAD, P_PAD), jnp.float32),
        jax.ShapeDtypeStruct((G, 8, 128), jnp.float32),
    )

    # cost estimate for the collapsed compute (advisory for XLA scheduling)
    inputs = (actions_flat, goal, relu_table, w_cls, b_cls)
    in_bytes = sum(int(a.size) * a.dtype.itemsize for a in inputs)
    out_bytes = B_PAD * P_PAD * 4 + G * 8 * 128 * 4
    cost = pl.CostEstimate(
        flops=int(2 * B_PAD * A_PAD * H_PAD          # hist @ relu_table
                  + 2 * B_PAD * H_PAD * P_PAD        # classifier
                  + B_PAD * T_PAD * A_PAD),          # one-hot build + reduce
        transcendentals=int(B_PAD * P_PAD),          # softmax exp
        bytes_accessed=int(in_bytes + out_bytes),
    )

    # size scoped VMEM from the actual per-step footprint (double-buffered tiles
    # + the BT-sized one-hot intermediate), with headroom; cap at 64 MiB (v7x).
    tile_in = BT_TILE * 4 + B_TILE * 4 + A_PAD * H_PAD * 2 + H_PAD * P_PAD * 2 + P_PAD * 4
    tile_out = B_TILE * P_PAD * 4 + 8 * 128 * 4
    interm = 2 * BT_TILE * A_PAD * 4
    vmem_limit = int(min(64 << 20, max(8 << 20,
                                       2 * (tile_in + tile_out) + interm + (1 << 20))))

    return pl.pallas_call(
        kernel,
        out_shape=out_shape,
        grid_spec=pltpu.PrefetchScalarGridSpec(
            num_scalar_prefetch=0,
            grid=(G,),
            in_specs=in_specs,
            out_specs=out_specs,
        ),
        compiler_params=pltpu.CompilerParams(
            dimension_semantics=("parallel",),
            vmem_limit_bytes=vmem_limit,
        ),
        cost_estimate=cost,
    )(*inputs)


# -----------------------------------------------------------------------------
# ActionDemo2Predicate (model_type='avg') — JAX/Pallas implementation
# -----------------------------------------------------------------------------
class ActionDemo2PredicatePallas:
    def __init__(self, num_actions=10, emb_dim=32, hidden=32, num_predicates=16,
                 key=None):
        if key is None:
            key = jax.random.PRNGKey(0)
        k0, k1, k2, k3, k4 = jax.random.split(key, 5)
        s = 0.1
        self.num_actions = num_actions
        self.num_predicates = num_predicates

        # +1: reserve a sentinel action id for invalid/padded timesteps
        a_pad = _round_up(num_actions + 1, 128)
        h_pad = _round_up(hidden, 128)
        p_pad = _round_up(num_predicates, 128)

        table = s * jax.random.normal(k0, (num_actions, emb_dim), jnp.float32)
        w_enc = s * jax.random.normal(k1, (emb_dim, hidden), jnp.float32)
        b_enc = s * jax.random.normal(k2, (1, hidden), jnp.float32)
        w_cls = s * jax.random.normal(k3, (hidden, num_predicates), jnp.float32)
        b_cls = s * jax.random.normal(k4, (1, num_predicates), jnp.float32)

        # Algebraic collapse of the 'avg' encoder: the per-timestep Linear+ReLU
        # depends only on the action id, so precompute relu(table @ W_enc + b_enc)
        # once in f32 and let the kernel pool with a mask-weighted action histogram.
        # Rows >= num_actions (including the sentinel) are zero, so invalid
        # timesteps contribute nothing.
        relu_table = jax.nn.relu(table @ w_enc + b_enc)             # (A, hidden)
        rt = jnp.zeros((a_pad, h_pad), jnp.float32)
        rt = rt.at[:num_actions, :hidden].set(relu_table)
        self.relu_table = rt.astype(jnp.bfloat16)                   # MXU operand

        wc = jnp.zeros((h_pad, p_pad), jnp.float32).at[:hidden, :num_predicates].set(w_cls)
        self.w_cls = wc.astype(jnp.bfloat16)                        # MXU operand
        self.b_cls = jnp.zeros((1, p_pad), jnp.float32).at[:, :num_predicates].set(b_cls)

    def forward(self, actions, lengths, goal_index):
        """actions: (B, T) int32 action ids; lengths: (B,) int32 valid lengths;
        goal_index: (B,) int32 target predicate ids.  Returns (loss, info)."""
        B, T = actions.shape
        sentinel = self.num_actions      # zero row of relu_table

        # T padded to a multiple of 8 (free sublane group-reduce in-kernel);
        # B padded/tiled: >=8 rows per tile (block rule), tile capped so the
        # per-step one-hot stays well inside v7x's 64 MiB VMEM, and larger tiles
        # (toward 256 rows) improve MXU occupancy on v6e/v7x at large B.
        T_PAD = _round_up(max(T, 1), 8)
        B_TILE = max(8, min(256, _round_up(B, 8), (8192 // T_PAD) // 8 * 8))
        B_PAD = _round_up(B, B_TILE)
        G = B_PAD // B_TILE

        # NOTE: the original _sort_by_length reorder is intentionally dropped: for
        # the 'avg' encoder loss/top1 are batch means (order invariant); per-sample
        # logits are returned in the caller's input order.
        t_idx = jnp.arange(T, dtype=jnp.int32)[None, :]
        act = jnp.where(t_idx < lengths[:, None].astype(jnp.int32),
                        actions.astype(jnp.int32), sentinel)
        act = jnp.pad(act, ((0, B_PAD - B), (0, T_PAD - T)), constant_values=sentinel)
        goal = jnp.pad(goal_index.astype(jnp.int32), (0, B_PAD - B), constant_values=-1)

        actions_flat = act.reshape(B_PAD * T_PAD, 1)
        goal_col = goal.reshape(B_PAD, 1)

        logits_pad, stats = _run_kernel(
            actions_flat, goal_col, self.relu_table, self.w_cls, self.b_cls,
            B_TILE=B_TILE, T_PAD=T_PAD, G=G,
            num_actions=self.num_actions, P=self.num_predicates)

        # combine per-tile partial sums (required for the "parallel" grid axis)
        loss = jnp.sum(stats[:, 0, 0]) / B
        top1 = jnp.sum(stats[:, 1, 0]) * (100.0 / B)
        logits = logits_pad[:B, :self.num_predicates]
        info = {"loss": loss, "top1": top1, "prob": logits}
        return loss, info


if __name__ == "__main__":
    key = jax.random.PRNGKey(0)
    k_model, k_act, k_len, k_goal = jax.random.split(key, 4)

    B, T = 2, 8
    num_actions, emb_dim, hidden, num_predicates = 10, 32, 32, 16

    model = ActionDemo2PredicatePallas(
        num_actions=num_actions, emb_dim=emb_dim, hidden=hidden,
        num_predicates=num_predicates, key=k_model)

    actions = jax.random.randint(k_act, (B, T), 0, num_actions, dtype=jnp.int32)
    lengths = jax.random.randint(k_len, (B,), 3, T + 1, dtype=jnp.int32)
    goal_index = jax.random.randint(k_goal, (B,), 0, num_predicates, dtype=jnp.int32)

    loss, info = model.forward(actions, lengths, goal_index)
    jax.block_until_ready((loss, info["top1"], info["prob"]))

    # pure-JAX reference (mirrors the kernel's bf16 operand rounding)
    f32 = jnp.float32
    rt = model.relu_table.astype(f32)                                 # (A_PAD, H_PAD)
    valid = jnp.arange(T)[None, :] < lengths[:, None]                 # (B, T)
    gathered = rt[actions]                                            # (B, T, H_PAD)
    emb_raw = jnp.sum(jnp.where(valid[:, :, None], gathered, 0.0), axis=1)
    cnt = jnp.maximum(valid.sum(axis=1), 1).astype(f32)[:, None]
    emb_ref = (emb_raw / cnt).astype(jnp.bfloat16).astype(f32)
    logits_ref = (emb_ref @ model.w_cls.astype(f32) + model.b_cls)[:, :num_predicates]
    logp = jax.nn.log_softmax(logits_ref, axis=-1)
    loss_ref = -jnp.mean(logp[jnp.arange(B), goal_index])
    top1_ref = 100.0 * jnp.mean(
        (jnp.argmax(logits_ref, axis=-1) == goal_index).astype(f32))

    assert jnp.allclose(loss, loss_ref, atol=1e-4, rtol=1e-3), (loss, loss_ref)
    assert jnp.allclose(info["prob"], logits_ref, atol=1e-4, rtol=1e-3)
    # tie-break convention differs from torch.argmax only on exact ties
    assert jnp.allclose(info["top1"], top1_ref, atol=1e-3), (info["top1"], top1_ref)

    print("KERNEL_OK")
</pallas_src>

<mosaic_0001>
module attributes {stable_mosaic.version = 11 : i64} {
  func.func @_demo2predicate_kernel(%arg0: i32, %arg1: memref<64x1xi32, #tpu.memory_space<vmem>>, %arg2: memref<8x1xi32, #tpu.memory_space<vmem>>, %arg3: memref<128x128xbf16, #tpu.memory_space<vmem>>, %arg4: memref<128x128xbf16, #tpu.memory_space<vmem>>, %arg5: memref<1x128xf32, #tpu.memory_space<vmem>>, %arg6: memref<8x128xf32, #tpu.memory_space<vmem>>, %arg7: memref<1x8x128xf32, #tpu.memory_space<vmem>>) attributes {dimension_semantics = [#tpu.dimension_semantics<parallel>], iteration_bounds = array<i64: 1>, scalar_prefetch = 0 : i64, scratch_operands = 0 : i64, tpu.core_type = #tpu.core_type<tc>, window_params = [{transform_indices = @transform_0, window_bounds = array<i64: 64, 1>}, {transform_indices = @transform_1, window_bounds = array<i64: 8, 1>}, {pipeline_mode = #tpu.pipeline_mode<synchronous>, transform_indices = @transform_2, window_bounds = array<i64: 128, 128>}, {pipeline_mode = #tpu.pipeline_mode<synchronous>, transform_indices = @transform_3, window_bounds = array<i64: 128, 128>}, {pipeline_mode = #tpu.pipeline_mode<synchronous>, transform_indices = @transform_4, window_bounds = array<i64: 1, 128>}, {transform_indices = @transform_5, window_bounds = array<i64: 8, 128>}, {transform_indices = @transform_6, window_bounds = array<i64: 1, 8, 128>}]} {
    %c0 = arith.constant 0 : index
    %c0_0 = arith.constant 0 : index
    %0 = vector.load %arg1[%c0, %c0_0] : memref<64x1xi32, #tpu.memory_space<vmem>>, vector<64x1xi32>
    %1 = tpu.iota {dimensions = array<i32: 1>} : vector<64x128xi32>
    %2 = vector.broadcast %0 : vector<64x1xi32> to vector<64x128xi32>
    %3 = arith.cmpi eq, %1, %2 : vector<64x128xi32>
    %4 = arith.extui %3 : vector<64x128xi1> to vector<64x128xi32>
    %5 = arith.sitofp %4 : vector<64x128xi32> to vector<64x128xf32>
    %6 = vector.shape_cast %5 : vector<64x128xf32> to vector<8x8x128xf32>
    %cst = arith.constant dense<0.000000e+00> : vector<8x128xf32>
    %7 = vector.multi_reduction <add>, %6, %cst [1] : vector<8x8x128xf32> to vector<8x128xf32>
    %8 = tpu.iota {dimensions = array<i32: 1>} : vector<8x128xi32>
    %c10_i32 = arith.constant 10 : i32
    %9 = vector.broadcast %c10_i32 : i32 to vector<8x128xi32>
    %10 = arith.cmpi slt, %8, %9 : vector<8x128xi32>
    %cst_1 = arith.constant 0.000000e+00 : f32
    %11 = vector.broadcast %cst_1 : f32 to vector<8x128xf32>
    %12 = arith.select %10, %7, %11 : vector<8x128xi1>, vector<8x128xf32>
    %cst_2 = arith.constant dense<0.000000e+00> : vector<8xf32>
    %13 = vector.multi_reduction <add>, %12, %cst_2 [1] : vector<8x128xf32> to vector<8xf32>
    %14 = vector.shape_cast %13 : vector<8xf32> to vector<8x1xf32>
    %cst_3 = arith.constant 1.000000e+00 : f32
    %15 = vector.broadcast %cst_3 : f32 to vector<8x1xf32>
    %16 = arith.maximumf %14, %15 : vector<8x1xf32>
    %17 = tpu.reciprocal %16 : vector<8x1xf32> -> vector<8x1xf32>
    %18 = arith.truncf %7 : vector<8x128xf32> to vector<8x128xbf16>
    %c0_4 = arith.constant 0 : index
    %c0_5 = arith.constant 0 : index
    %19 = vector.load %arg3[%c0_4, %c0_5] : memref<128x128xbf16, #tpu.memory_space<vmem>>, vector<128x128xbf16>
    %cst_6 = arith.constant dense<0.000000e+00> : vector<8x128xf32>
    %20 = tpu.matmul %18, %19, %cst_6 {dimension_numbers = #tpu.dot_dimension_numbers<[1], [0], [0], [1], [0, 0, 1, 1], [], []>} : vector<8x128xbf16>, vector<128x128xbf16>, vector<8x128xf32> -> vector<8x128xf32>
    %21 = vector.broadcast %17 : vector<8x1xf32> to vector<8x128xf32>
    %22 = arith.mulf %20, %21 : vector<8x128xf32>
    %23 = arith.truncf %22 : vector<8x128xf32> to vector<8x128xbf16>
    %c0_7 = arith.constant 0 : index
    %c0_8 = arith.constant 0 : index
    %24 = vector.load %arg4[%c0_7, %c0_8] : memref<128x128xbf16, #tpu.memory_space<vmem>>, vector<128x128xbf16>
    %cst_9 = arith.constant dense<0.000000e+00> : vector<8x128xf32>
    %25 = tpu.matmul %23, %24, %cst_9 {dimension_numbers = #tpu.dot_dimension_numbers<[1], [0], [0], [1], [0, 0, 1, 1], [], []>} : vector<8x128xbf16>, vector<128x128xbf16>, vector<8x128xf32> -> vector<8x128xf32>
    %c0_10 = arith.constant 0 : index
    %c0_11 = arith.constant 0 : index
    %26 = vector.load %arg5[%c0_10, %c0_11] : memref<1x128xf32, #tpu.memory_space<vmem>>, vector<1x128xf32>
    %27 = vector.broadcast %26 : vector<1x128xf32> to vector<8x128xf32>
    %28 = arith.addf %25, %27 : vector<8x128xf32>
    %c0_12 = arith.constant 0 : index
    %c0_13 = arith.constant 0 : index
    %29 = vector.load %arg6[%c0_12, %c0_13] : memref<8x128xf32, #tpu.memory_space<vmem>>, vector<8x128xf32>
    tpu.vector_store %arg6[%c0_12, %c0_13], %28 {strides = array<i32>} : memref<8x128xf32, #tpu.memory_space<vmem>>, vector<8x128xf32>,
    %30 = tpu.iota {dimensions = array<i32: 1>} : vector<8x128xi32>
    %c16_i32 = arith.constant 16 : i32
    %31 = vector.broadcast %c16_i32 : i32 to vector<8x128xi32>
    %32 = arith.cmpi slt, %30, %31 : vector<8x128xi32>
    %cst_14 = arith.constant -1.000000e+30 : f32
    %33 = vector.broadcast %cst_14 : f32 to vector<8x128xf32>
    %34 = arith.select %32, %28, %33 : vector<8x128xi1>, vector<8x128xf32>
    %cst_15 = arith.constant dense<0xFF800000> : vector<8xf32>
    %35 = vector.multi_reduction <maximumf>, %34, %cst_15 [1] : vector<8x128xf32> to vector<8xf32>
    %36 = vector.shape_cast %35 : vector<8xf32> to vector<8x1xf32>
    %37 = vector.broadcast %36 : vector<8x1xf32> to vector<8x128xf32>
    %38 = arith.subf %34, %37 : vector<8x128xf32>
    %39 = math.exp %38 : vector<8x128xf32>
    %cst_16 = arith.constant dense<0.000000e+00> : vector<8xf32>
    %40 = vector.multi_reduction <add>, %39, %cst_16 [1] : vector<8x128xf32> to vector<8xf32>
    %41 = vector.shape_cast %40 : vector<8xf32> to vector<8x1xf32>
    %42 = math.log %41 : vector<8x1xf32>
    %43 = arith.addf %42, %36 : vector<8x1xf32>
    %44 = vector.broadcast %43 : vector<8x1xf32> to vector<8x128xf32>
    %45 = arith.subf %34, %44 : vector<8x128xf32>
    %c0_17 = arith.constant 0 : index
    %c0_18 = arith.constant 0 : index
    %46 = vector.load %arg2[%c0_17, %c0_18] : memref<8x1xi32, #tpu.memory_space<vmem>>, vector<8x1xi32>
    %47 = vector.broadcast %46 : vector<8x1xi32> to vector<8x128xi32>
    %48 = arith.cmpi eq, %30, %47 : vector<8x128xi32>
    %49 = arith.extui %48 : vector<8x128xi1> to vector<8x128xi32>
    %50 = arith.sitofp %49 : vector<8x128xi32> to vector<8x128xf32>
    %51 = arith.mulf %50, %45 : vector<8x128xf32>
    %cst_19 = arith.constant dense<0.000000e+00> : vector<8xf32>
    %52 = vector.multi_reduction <add>, %51, %cst_19 [1] : vector<8x128xf32> to vector<8xf32>
    %53 = vector.shape_cast %52 : vector<8xf32> to vector<8x1xf32>
    %cst_20 = arith.constant 0.000000e+00 : f32
    %54 = vector.broadcast %cst_20 : f32 to vector<8x1xf32>
    %55 = arith.subf %54, %53 : vector<8x1xf32>
    %56 = vector.broadcast %36 : vector<8x1xf32> to vector<8x128xf32>
    %57 = arith.cmpf oge, %34, %56 : vector<8x128xf32>
    %58 = arith.extui %57 : vector<8x128xi1> to vector<8x128xi32>
    %59 = arith.sitofp %58 : vector<8x128xi32> to vector<8x128xf32>
    %60 = arith.mulf %50, %59 : vector<8x128xf32>
    %cst_21 = arith.constant dense<0.000000e+00> : vector<8xf32>
    %61 = vector.multi_reduction <add>, %60, %cst_21 [1] : vector<8x128xf32> to vector<8xf32>
    %62 = vector.shape_cast %61 : vector<8xf32> to vector<8x1xf32>
    %cst_22 = arith.constant 1.000000e+00 : f32
    %63 = vector.broadcast %cst_22 : f32 to vector<8x1xf32>
    %64 = arith.minimumf %62, %63 : vector<8x1xf32>
    %cst_23 = arith.constant dense<0.000000e+00> : vector<1xf32>
    %65 = vector.multi_reduction <add>, %55, %cst_23 [0] : vector<8x1xf32> to vector<1xf32>
    %66 = vector.shape_cast %65 : vector<1xf32> to vector<1x1xf32>
    %cst_24 = arith.constant dense<0.000000e+00> : vector<1xf32>
    %67 = vector.multi_reduction <add>, %64, %cst_24 [0] : vector<8x1xf32> to vector<1xf32>
    %68 = vector.shape_cast %67 : vector<1xf32> to vector<1x1xf32>
    %69 = tpu.iota {dimensions = array<i32: 0>} : vector<8x128xi32>
    %c0_i32 = arith.constant 0 : i32
    %70 = vector.broadcast %c0_i32 : i32 to vector<8x128xi32>
    %71 = arith.cmpi eq, %69, %70 : vector<8x128xi32>
    %c1_i32 = arith.constant 1 : i32
    %72 = vector.broadcast %c1_i32 : i32 to vector<8x128xi32>
    %73 = arith.cmpi eq, %69, %72 : vector<8x128xi32>
    %cst_25 = arith.constant 0.000000e+00 : f32
    %74 = vector.shape_cast %68 : vector<1x1xf32> to vector<1x1xf32>
    %75 = vector.broadcast %74 : vector<1x1xf32> to vector<8x128xf32>
    %76 = vector.broadcast %cst_25 : f32 to vector<8x128xf32>
    %77 = arith.select %73, %75, %76 : vector<8x128xi1>, vector<8x128xf32>
    %78 = vector.shape_cast %66 : vector<1x1xf32> to vector<1x1xf32>
    %79 = vector.broadcast %78 : vector<1x1xf32> to vector<8x128xf32>
    %80 = arith.select %71, %79, %77 : vector<8x128xi1>, vector<8x128xf32>
    %c0_26 = arith.constant 0 : index
    %c0_27 = arith.constant 0 : index
    %c0_28 = arith.constant 0 : index
    %81 = vector.load %arg7[%c0_26, %c0_27, %c0_28] : memref<1x8x128xf32, #tpu.memory_space<vmem>>, vector<1x8x128xf32>
    %82 = vector.shape_cast %81 : vector<1x8x128xf32> to vector<8x128xf32>
    %83 = vector.shape_cast %80 : vector<8x128xf32> to vector<1x8x128xf32>
    tpu.vector_store %arg7[%c0_26, %c0_27, %c0_28], %83 {strides = array<i32>} : memref<1x8x128xf32, #tpu.memory_space<vmem>>, vector<1x8x128xf32>,
    return
  }
  func.func @transform_0(%arg0: i32) -> (i32, i32) {
    %c0_i32 = arith.constant 0 : i32
    %c0_i32_0 = arith.constant 0 : i32
    return %arg0, %c0_i32 : i32, i32
  }
  func.func @transform_1(%arg0: i32) -> (i32, i32) {
    %c0_i32 = arith.constant 0 : i32
    %c0_i32_0 = arith.constant 0 : i32
    return %arg0, %c0_i32 : i32, i32
  }
  func.func @transform_2(%arg0: i32) -> (i32, i32) {
    %c0_i32 = arith.constant 0 : i32
    %c0_i32_0 = arith.constant 0 : i32
    %c0_i32_1 = arith.constant 0 : i32
    return %c0_i32, %c0_i32_0 : i32, i32
  }
  func.func @transform_3(%arg0: i32) -> (i32, i32) {
    %c0_i32 = arith.constant 0 : i32
    %c0_i32_0 = arith.constant 0 : i32
    %c0_i32_1 = arith.constant 0 : i32
    return %c0_i32, %c0_i32_0 : i32, i32
  }
  func.func @transform_4(%arg0: i32) -> (i32, i32) {
    %c0_i32 = arith.constant 0 : i32
    %c0_i32_0 = arith.constant 0 : i32
    %c0_i32_1 = arith.constant 0 : i32
    return %c0_i32, %c0_i32_0 : i32, i32
  }
  func.func @transform_5(%arg0: i32) -> (i32, i32) {
    %c0_i32 = arith.constant 0 : i32
    %c0_i32_0 = arith.constant 0 : i32
    return %arg0, %c0_i32 : i32, i32
  }
  func.func @transform_6(%arg0: i32) -> (i32, i32, i32) {
    %c0_i32 = arith.constant 0 : i32
    %c0_i32_0 = arith.constant 0 : i32
    %c0_i32_1 = arith.constant 0 : i32
    return %arg0, %c0_i32, %c0_i32_0 : i32, i32, i32
  }
}

</mosaic_0001>

<llo_original>
// kernel: tpu_custom_call.1
$region0: #{tpu_custom_call.1}
  #allocation0 [shape = 'u32[]', space=smem, size = 0x4, offset = 0x4, fixed_abs, tag = 'smem constant byte address 0x4 - core index']
  #allocation1 [shape = 'u32[144,128]{1,0:T(1,128)}', space=vmem, size = 0x12000, scoped, tag = 'internal scratch']
  %s0 = inlined_call_operand.vmem [shape: s32[64,1], index: 0, kind: input, shape index: {}]
  %s1 = inlined_call_operand.vmem [shape: s32[8,1], index: 1, kind: input, shape index: {}]
  %s2 = inlined_call_operand.vmem [shape: bf16[128,128], index: 2, kind: input, shape index: {}]
  %s3 = inlined_call_operand.hbm [shape: bf16[128,128], index: 3, kind: input, shape index: {}]
  %s4 = inlined_call_operand.vmem [shape: f32[1,128], index: 4, kind: input, shape index: {}]
  %s5 = inlined_call_operand.hbm [shape: f32[8,128], index: 5, kind: output, shape index: {0}]
  %s6 = inlined_call_operand.hbm [shape: f32[1,8,128], index: 6, kind: output, shape index: {1}]
  %7 = xla_tuple %s5, %s6
  %s8 = sld [smem:[#allocation0]]
  $region42: #{tpu_custom_call.1} parent=0
    _
  %s10 = ssub.s32 1, %s8
  %s11 = scalar_select 0, %s10, %s8
  $region1: #{tpu_custom_call.1} parent=0
    #allocation2 [shape = 'u8[32768]{0}', space=vmem, size = 0x8000, scoped, tag = 'input window, operand 3, single buffered']
    #allocation3 [shape = 's32[1]{0}', space=sflag, size = 0x4, scoped, tag = 'scoped memory for tpu_custom_call.1']
    #allocation4 [shape = 's32[1]{0}', space=sflag, size = 0x4, scoped, tag = 'scoped memory for tpu_custom_call.1']
    #allocation5 [shape = 'u8[4096]{0}', space=vmem, size = 0x1000, scoped, tag = 'output window, operand 0, single buffered']
    #allocation6 [shape = 'u8[4096]{0}', space=vmem, size = 0x1000, scoped, tag = 'output window, operand 1, single buffered']
    #allocation7 [shape = 's32[1]{0}', space=sflag, size = 0x4, scoped, tag = 'scoped memory for tpu_custom_call.1']
    %12 = vsyncpa [#allocation3], 0
    %13 = vsyncpa [#allocation4], 0
    %14 = vsyncpa [#allocation7], 0
    // Predicated region
    $region2: #{tpu_custom_call.1} parent=1 // pred_check
      _
    $region3: #{tpu_custom_call.1} parent=1 // pred_check_branch
      %16 = sbr.rel (0) target = $region5
    $region4: #{tpu_custom_call.1} parent=1 // pred_region
      _
    $region5: #{tpu_custom_call.1} parent=1 // pred_fallthru
      _
    // Predicated region
    $region6: #{tpu_custom_call.1} parent=1 // pred_check
      _
    $region7: #{tpu_custom_call.1} parent=1 // pred_check_branch
      %18 = sbr.rel (0) target = $region9
    $region8: #{tpu_custom_call.1} parent=1 // pred_region
      _
    $region9: #{tpu_custom_call.1} parent=1 // pred_fallthru
      _
    // Predicated region
    $region10: #{tpu_custom_call.1} parent=1 // pred_check
      _
    $region11: #{tpu_custom_call.1} parent=1 // pred_check_branch
      %20 = sbr.rel (0) target = $region13
    $region12: #{tpu_custom_call.1} parent=1 // pred_region
      _
    $region13: #{tpu_custom_call.1} parent=1 // pred_fallthru
      _
    // Predicated region
    $region14: #{tpu_custom_call.1} parent=1 // pred_check
      _
    $region15: #{tpu_custom_call.1} parent=1 // pred_check_branch
      %22 = sbr.rel (0) target = $region17
    $region16: #{tpu_custom_call.1} parent=1 // pred_region
      %s24 = ssub.s32 1024, 1024
      %25 = vsyncadd [#allocation3], %s24
      %s26 = sshll.u32 [#allocation2], 4
      %s27 = int_to_ptr.vmem [resolvable:$true] %s26
      %32 = dma.hbm_to_vmem [thread:$0]  %s3, 1024, %s27, [#allocation3], 64, 64, 4
    $region17: #{tpu_custom_call.1} parent=1 // pred_fallthru
      _
    // Predicated region
    $region18: #{tpu_custom_call.1} parent=1 // pred_check
      _
    $region19: #{tpu_custom_call.1} parent=1 // pred_check_branch
      %34 = sbr.rel (0) target = $region21
    $region20: #{tpu_custom_call.1} parent=1 // pred_region
      _
    $region21: #{tpu_custom_call.1} parent=1 // pred_fallthru
      _
    // Predicated region
    $region22: #{tpu_custom_call.1} parent=1 // pred_check
      _
    $region23: #{tpu_custom_call.1} parent=1 // pred_check_branch
      %36 = sbr.rel (0) target = $region25
    $region24: #{tpu_custom_call.1} parent=1 // pred_region
      %37 = dma.done [#allocation3], 1024
    $region25: #{tpu_custom_call.1} parent=1 // pred_fallthru
      _
    %v39 = vld [vmem:[%s0] sm:$0xff]
    %v40 = vld [vmem:[%s0 + $0x8] sm:$0xff]
    %v41 = vld [vmem:[%s0 + $0x10] sm:$0xff]
    %v42 = vld [vmem:[%s0 + $0x18] sm:$0xff]
    %v43 = vld [vmem:[%s0 + $0x20] sm:$0xff]
    %v44 = vld [vmem:[%s0 + $0x28] sm:$0xff]
    %v45 = vld [vmem:[%s0 + $0x30] sm:$0xff]
    %v46 = vld [vmem:[%s0 + $0x38] sm:$0xff]
    %v47 = vlaneseq
    %v48 = vand.u32 %v47, 127
    %49 = vset.pattern.permute.xlu0 0
    %50 = vperm.xlu0 %49, %v39
    %v51 = vpop.permute.xlu0 %50
    %52 = vset.pattern.permute.xlu0 0
    %53 = vperm.xlu0 %52, %v40
    %v54 = vpop.permute.xlu0 %53
    %55 = vset.pattern.permute.xlu0 0
    %56 = vperm.xlu0 %55, %v41
    %v57 = vpop.permute.xlu0 %56
    %58 = vset.pattern.permute.xlu0 0
    %59 = vperm.xlu0 %58, %v42
    %v60 = vpop.permute.xlu0 %59
    %61 = vset.pattern.permute.xlu0 0
    %62 = vperm.xlu0 %61, %v43
    %v63 = vpop.permute.xlu0 %62
    %64 = vset.pattern.permute.xlu0 0
    %65 = vperm.xlu0 %64, %v44
    %v66 = vpop.permute.xlu0 %65
    %67 = vset.pattern.permute.xlu0 0
    %68 = vperm.xlu0 %67, %v45
    %v69 = vpop.permute.xlu0 %68
    %70 = vset.pattern.permute.xlu0 0
    %71 = vperm.xlu0 %70, %v46
    %v72 = vpop.permute.xlu0 %71
    %vm73 = vcmp.eq.s32.totalorder %v48, %v51
    %vm74 = vcmp.eq.s32.totalorder %v48, %v54
    %vm75 = vcmp.eq.s32.totalorder %v48, %v57
    %vm76 = vcmp.eq.s32.totalorder %v48, %v60
    %vm77 = vcmp.eq.s32.totalorder %v48, %v63
    %vm78 = vcmp.eq.s32.totalorder %v48, %v66
    %vm79 = vcmp.eq.s32.totalorder %v48, %v69
    %vm80 = vcmp.eq.s32.totalorder %v48, %v72
    %v81 = vsel %vm73, 1, 0
    %v82 = vsel %vm74, 1, 0
    %v83 = vsel %vm75, 1, 0
    %v84 = vsel %vm76, 1, 0
    %v85 = vsel %vm77, 1, 0
    %v86 = vsel %vm78, 1, 0
    %v87 = vsel %vm79, 1, 0
    %v88 = vsel %vm80, 1, 0
    %v89 = vcvt.s32.f32 %v81
    %v90 = vcvt.s32.f32 %v82
    %v91 = vcvt.s32.f32 %v83
    %v92 = vcvt.s32.f32 %v84
    %v93 = vcvt.s32.f32 %v85
    %v94 = vcvt.s32.f32 %v86
    %v95 = vcvt.s32.f32 %v87
    %v96 = vcvt.s32.f32 %v88
    %v97 = vrot.slane %v89, 4
    %v98 = vadd.f32 %v89, %v97
    %v99 = vrot.slane %v98, 2
    %v100 = vadd.f32 %v98, %v99
    %v101 = vrot.slane %v100, 1
    %v102 = vadd.f32 %v100, %v101
    %v103 = vrot.slane %v90, 4
    %v104 = vadd.f32 %v90, %v103
    %v105 = vrot.slane %v104, 2
    %v106 = vadd.f32 %v104, %v105
    %v107 = vrot.slane %v106, 1
    %v108 = vadd.f32 %v106, %v107
    %v109 = vrot.slane %v91, 4
    %v110 = vadd.f32 %v91, %v109
    %v111 = vrot.slane %v110, 2
    %v112 = vadd.f32 %v110, %v111
    %v113 = vrot.slane %v112, 1
    %v114 = vadd.f32 %v112, %v113
    %v115 = vrot.slane %v92, 4
    %v116 = vadd.f32 %v92, %v115
    %v117 = vrot.slane %v116, 2
    %v118 = vadd.f32 %v116, %v117
    %v119 = vrot.slane %v118, 1
    %v120 = vadd.f32 %v118, %v119
    %v121 = vrot.slane %v93, 4
    %v122 = vadd.f32 %v93, %v121
    %v123 = vrot.slane %v122, 2
    %v124 = vadd.f32 %v122, %v123
    %v125 = vrot.slane %v124, 1
    %v126 = vadd.f32 %v124, %v125
    %v127 = vrot.slane %v94, 4
    %v128 = vadd.f32 %v94, %v127
    %v129 = vrot.slane %v128, 2
    %v130 = vadd.f32 %v128, %v129
    %v131 = vrot.slane %v130, 1
    %v132 = vadd.f32 %v130, %v131
    %v133 = vrot.slane %v95, 4
    %v134 = vadd.f32 %v95, %v133
    %v135 = vrot.slane %v134, 2
    %v136 = vadd.f32 %v134, %v135
    %v137 = vrot.slane %v136, 1
    %v138 = vadd.f32 %v136, %v137
    %v139 = vrot.slane %v96, 4
    %v140 = vadd.f32 %v96, %v139
    %v141 = vrot.slane %v140, 2
    %v142 = vadd.f32 %v140, %v141
    %v143 = vrot.slane %v142, 1
    %v144 = vadd.f32 %v142, %v143
    %vm145 = vcmp.lt.s32.totalorder %v48, 10
    %vm154 = vcmask 1041409
    %v155 = vsel %vm154, %v108, %v102
    %vm156 = vcmask 1042434
    %v157 = vsel %vm156, %v114, %v155
    %vm158 = vcmask 1043459
    %v159 = vsel %vm158, %v120, %v157
    %vm160 = vcmask 1044484
    %v161 = vsel %vm160, %v126, %v159
    %vm162 = vcmask 1045509
    %v163 = vsel %vm162, %v132, %v161
    %vm164 = vcmask 1046534
    %v165 = vsel %vm164, %v138, %v163
    %vm166 = vcmask 1047559
    %v167 = vsel %vm166, %v144, %v165
    %v169 = vsel %vm145, %v167, 0.0
    %170 = vadd.xlane.f32.xlu0 %v169
    %v171 = vpop.xlane.xlu0 %170
    %v172 = vmax.f32 %v171, 1.0
    %v173 = vrcp.pop %v172
    %v174 = vpack.c.bf16 %v102, %v102
    %v175 = vpack.c.bf16 %v108, %v108
    %v176 = vpack.c.bf16 %v114, %v114
    %v177 = vpack.c.bf16 %v120, %v120
    %v178 = vpack.c.bf16 %v126, %v126
    %v179 = vpack.c.bf16 %v132, %v132
    %v180 = vpack.c.bf16 %v138, %v138
    %v181 = vpack.c.bf16 %v144, %v144
    %v182 = vld [vmem:[%s2] sm:$0xf]
    %v183 = vld [vmem:[%s2 + $0x4] sm:$0xf]
    %v184 = vld [vmem:[%s2 + $0x8] sm:$0xf]
    %v185 = vld [vmem:[%s2 + $0xc] sm:$0xf]
    %v186 = vld [vmem:[%s2 + $0x10] sm:$0xf]
    %v187 = vld [vmem:[%s2 + $0x14] sm:$0xf]
    %v188 = vld [vmem:[%s2 + $0x18] sm:$0xf]
    %v189 = vld [vmem:[%s2 + $0x1c] sm:$0xf]
    %v190 = vld [vmem:[%s2 + $0x20] sm:$0xf]
    %v191 = vld [vmem:[%s2 + $0x24] sm:$0xf]
    %v192 = vld [vmem:[%s2 + $0x28] sm:$0xf]
    %v193 = vld [vmem:[%s2 + $0x2c] sm:$0xf]
    %v194 = vld [vmem:[%s2 + $0x30] sm:$0xf]
    %v195 = vld [vmem:[%s2 + $0x34] sm:$0xf]
    %v196 = vld [vmem:[%s2 + $0x38] sm:$0xf]
    %v197 = vld [vmem:[%s2 + $0x3c] sm:$0xf]
    %v206 = vunpack.c.l.b16 %v174
    %v207 = vunpack.c.l.b16 %v175
    %v208 = vunpack.c.l.b16 %v176
    %v209 = vunpack.c.l.b16 %v177
    %v210 = vunpack.c.l.b16 %v178
    %v211 = vunpack.c.l.b16 %v179
    %v212 = vunpack.c.l.b16 %v180
    %v213 = vunpack.c.l.b16 %v181
    %v214 = vsel %vm154, %v207, %v206
    %v215 = vsel %vm156, %v208, %v214
    %v216 = vsel %vm158, %v209, %v215
    %v217 = vsel %vm160, %v210, %v216
    %v218 = vsel %vm162, %v211, %v217
    %v219 = vsel %vm164, %v212, %v218
    %v220 = vsel %vm166, %v213, %v219
    %v221 = vpack.c.b16 %v220, %v220
    %v239 = vunpack.c.l.b16 %v182
    %v240 = vunpack.c.l.b16 %v183
    %v241 = vunpack.c.l.b16 %v184
    %v242 = vunpack.c.l.b16 %v185
    %v243 = vunpack.c.l.b16 %v186
    %v244 = vunpack.c.l.b16 %v187
    %v245 = vunpack.c.l.b16 %v188
    %v246 = vunpack.c.l.b16 %v189
    %v247 = vunpack.c.l.b16 %v190
    %v248 = vunpack.c.l.b16 %v191
    %v249 = vunpack.c.l.b16 %v192
    %v250 = vunpack.c.l.b16 %v193
    %v251 = vunpack.c.l.b16 %v194
    %v252 = vunpack.c.l.b16 %v195
    %v253 = vunpack.c.l.b16 %v196
    %v254 = vunpack.c.l.b16 %v197
    %v255 = vpack.c.b16 %v240, %v239
    %v256 = vpack.c.b16 %v242, %v241
    %v257 = vpack.c.b16 %v244, %v243
    %v258 = vpack.c.b16 %v246, %v245
    %v259 = vpack.c.b16 %v248, %v247
    %v260 = vpack.c.b16 %v250, %v249
    %v261 = vpack.c.b16 %v252, %v251
    %v262 = vpack.c.b16 %v254, %v253
    %271 = vmatprep.subr.bf16.mxu0 0
    %272 = vmatpush1.bf16.msra.mxu0 %v262
    %273 = vmatprep.subr.bf16.mxu0 0
    %274 = vmatpush1.bf16.msra.mxu0 %v261
    %275 = vmatprep.subr.bf16.mxu0 0
    %276 = vmatpush1.bf16.msra.mxu0 %v260
    %277 = vmatprep.subr.bf16.mxu0 0
    %278 = vmatpush1.bf16.msra.mxu0 %v259
    %279 = vmatprep.subr.bf16.mxu0 0
    %280 = vmatpush1.bf16.msra.mxu0 %v258
    %281 = vmatprep.subr.bf16.mxu0 0
    %282 = vmatpush1.bf16.msra.mxu0 %v257
    %283 = vmatprep.subr.bf16.mxu0 0
    %284 = vmatpush1.bf16.msra.mxu0 %v256
    %285 = vmatprep.subr.bf16.mxu0 0
    %286 = vmatpush1.bf16.msra.mxu0 %v255
    %287 = vmatprep.subr.bf16.mxu0 0
    %288 = vmatpush2.bf16.msra.mxu0 0
    %289 = vmatprep.subr.bf16.mxu0 0
    %290 = vmatpush2.bf16.msra.mxu0 0
    %291 = vmatprep.subr.bf16.mxu0 0
    %292 = vmatpush2.bf16.msra.mxu0 0
    %293 = vmatprep.subr.bf16.mxu0 0
    %294 = vmatpush2.bf16.msra.mxu0 0
    %295 = vmatprep.subr.bf16.mxu0 0
    %296 = vmatpush2.bf16.msra.mxu0 0
    %297 = vmatprep.subr.bf16.mxu0 0
    %298 = vmatpush2.bf16.msra.mxu0 0
    %299 = vmatprep.subr.bf16.mxu0 0
    %300 = vmatpush2.bf16.msra.mxu0 0
    %301 = vmatprep.subr.bf16.mxu0 0
    %302 = vmatpush2.bf16.msra.mxu0 0
    %303 = vmatprep.mubr.bf16.mxu0 0
    %304 = vmatmul.mubr.bf16.gmra.mxu0 %v221
    %v305 = vpop.f32.mrf.mxu0
    %v306 = vadd.f32 0.0, %v305
    %v307 = vpop.f32.mrf.mxu0
    %v308 = vpop.f32.mrf.mxu0
    %v309 = vpop.f32.mrf.mxu0
    %310 = vdwg.mxu0
    %v311 = vmul.f32 %v306, %v173
    %v312 = vpack.c.bf16 %v311, %v311
    %v313 = vld [vmem:[#allocation2] sm:$0xf]
    %v314 = vld [vmem:[#allocation2 + $0x4] sm:$0xf]
    %v315 = vld [vmem:[#allocation2 + $0x8] sm:$0xf]
    %v316 = vld [vmem:[#allocation2 + $0xc] sm:$0xf]
    %v317 = vld [vmem:[#allocation2 + $0x10] sm:$0xf]
    %v318 = vld [vmem:[#allocation2 + $0x14] sm:$0xf]
    %v319 = vld [vmem:[#allocation2 + $0x18] sm:$0xf]
    %v320 = vld [vmem:[#allocation2 + $0x1c] sm:$0xf]
    %v321 = vld [vmem:[#allocation2 + $0x20] sm:$0xf]
    %v322 = vld [vmem:[#allocation2 + $0x24] sm:$0xf]
    %v323 = vld [vmem:[#allocation2 + $0x28] sm:$0xf]
    %v324 = vld [vmem:[#allocation2 + $0x2c] sm:$0xf]
    %v325 = vld [vmem:[#allocation2 + $0x30] sm:$0xf]
    %v326 = vld [vmem:[#allocation2 + $0x34] sm:$0xf]
    %v327 = vld [vmem:[#allocation2 + $0x38] sm:$0xf]
    %v328 = vld [vmem:[#allocation2 + $0x3c] sm:$0xf]
    %v329 = vld [vmem:[%s4] sm:$0x1]
    %v331 = vlaneseq
    %v332 = vshrl.u32 %v331, 7
    %v333 = vsub.s32 0, %v332
    %v334 = vrot.slane %v329, %v333
    %v352 = vunpack.c.l.b16 %v313
    %v353 = vunpack.c.l.b16 %v314
    %v354 = vunpack.c.l.b16 %v315
    %v355 = vunpack.c.l.b16 %v316
    %v356 = vunpack.c.l.b16 %v317
    %v357 = vunpack.c.l.b16 %v318
    %v358 = vunpack.c.l.b16 %v319
    %v359 = vunpack.c.l.b16 %v320
    %v360 = vunpack.c.l.b16 %v321
    %v361 = vunpack.c.l.b16 %v322
    %v362 = vunpack.c.l.b16 %v323
    %v363 = vunpack.c.l.b16 %v324
    %v364 = vunpack.c.l.b16 %v325
    %v365 = vunpack.c.l.b16 %v326
    %v366 = vunpack.c.l.b16 %v327
    %v367 = vunpack.c.l.b16 %v328
    %v368 = vpack.c.b16 %v353, %v352
    %v369 = vpack.c.b16 %v355, %v354
    %v370 = vpack.c.b16 %v357, %v356
    %v371 = vpack.c.b16 %v359, %v358
    %v372 = vpack.c.b16 %v361, %v360
    %v373 = vpack.c.b16 %v363, %v362
    %v374 = vpack.c.b16 %v365, %v364
    %v375 = vpack.c.b16 %v367, %v366
    %384 = vmatprep.subr.bf16.mxu0 0
    %385 = vmatpush1.bf16.msra.mxu0 %v375
    %386 = vmatprep.subr.bf16.mxu0 0
    %387 = vmatpush1.bf16.msra.mxu0 %v374
    %388 = vmatprep.subr.bf16.mxu0 0
    %389 = vmatpush1.bf16.msra.mxu0 %v373
    %390 = vmatprep.subr.bf16.mxu0 0
    %391 = vmatpush1.bf16.msra.mxu0 %v372
    %392 = vmatprep.subr.bf16.mxu0 0
    %393 = vmatpush1.bf16.msra.mxu0 %v371
    %394 = vmatprep.subr.bf16.mxu0 0
    %395 = vmatpush1.bf16.msra.mxu0 %v370
    %396 = vmatprep.subr.bf16.mxu0 0
    %397 = vmatpush1.bf16.msra.mxu0 %v369
    %398 = vmatprep.subr.bf16.mxu0 0
    %399 = vmatpush1.bf16.msra.mxu0 %v368
    %400 = vmatprep.subr.bf16.mxu0 0
    %401 = vmatpush2.bf16.msra.mxu0 0
    %402 = vmatprep.subr.bf16.mxu0 0
    %403 = vmatpush2.bf16.msra.mxu0 0
    %404 = vmatprep.subr.bf16.mxu0 0
    %405 = vmatpush2.bf16.msra.mxu0 0
    %406 = vmatprep.subr.bf16.mxu0 0
    %407 = vmatpush2.bf16.msra.mxu0 0
    %408 = vmatprep.subr.bf16.mxu0 0
    %409 = vmatpush2.bf16.msra.mxu0 0
    %410 = vmatprep.subr.bf16.mxu0 0
    %411 = vmatpush2.bf16.msra.mxu0 0
    %412 = vmatprep.subr.bf16.mxu0 0
    %413 = vmatpush2.bf16.msra.mxu0 0
    %414 = vmatprep.subr.bf16.mxu0 0
    %415 = vmatpush2.bf16.msra.mxu0 0
    %416 = vmatprep.mubr.bf16.mxu0 0
    %417 = vmatmul.mubr.bf16.gmra.mxu0 %v312
    %v418 = vpop.f32.mrf.mxu0
    %v419 = vadd.f32 %v334, %v418
    %v420 = vpop.f32.mrf.mxu0
    %v421 = vpop.f32.mrf.mxu0
    %v422 = vpop.f32.mrf.mxu0
    %423 = vdwg.mxu0
    %424 = vst [vmem:[#allocation5] sm:$0xff] %v419
    %vm425 = vcmp.lt.s32.totalorder %v48, 16
    %v426 = vsel %vm425, %v419, -1e+30
    %427 = vmax.xlane.f32.xlu0 %v426
    %v428 = vpop.xlane.xlu0 %427
    %v429 = vsub.f32 %v426, %v428
    %v430 = vmul.f32 %v429, 1.442695
    %v431 = vpow.pop %v430
    %432 = vadd.xlane.f32.xlu0 %v431
    %v433 = vpop.xlane.xlu0 %432
    %v434 = vlog2.pop %v433
    %v435 = vmul.f32 %v434, 0.6931472
    %v436 = vadd.f32 %v435, %v428
    %v437 = vsub.f32 %v426, %v436
    %v438 = vld [vmem:[%s1] sm:$0xff]
    %439 = vset.pattern.permute.xlu0 0
    %440 = vperm.xlu0 %439, %v438
    %v441 = vpop.permute.xlu0 %440
    %vm442 = vcmp.eq.s32.totalorder %v48, %v441
    %v443 = vsel %vm442, 1, 0
    %v444 = vcvt.s32.f32 %v443
    %v445 = vmul.f32 %v444, %v437
    %446 = vadd.xlane.f32.xlu0 %v445
    %v447 = vpop.xlane.xlu0 %446
    %v448 = vsub.f32 0.0, %v447
    %vm449 = vcmp.ge.f32.partialorder %v426, %v428
    %v450 = vsel %vm449, 1, 0
    %v451 = vcvt.s32.f32 %v450
    %v452 = vmul.f32 %v444, %v451
    %453 = vadd.xlane.f32.xlu0 %v452
    %v454 = vpop.xlane.xlu0 %453
    %v455 = vmin.f32 %v454, 1.0
    %v456 = vrot.slane %v448, 4
    %v457 = vadd.f32 %v448, %v456
    %v458 = vrot.slane %v457, 2
    %v459 = vadd.f32 %v457, %v458
    %v460 = vrot.slane %v459, 1
    %v461 = vadd.f32 %v459, %v460
    %v462 = vrot.slane %v455, 4
    %v463 = vadd.f32 %v455, %v462
    %v464 = vrot.slane %v463, 2
    %v465 = vadd.f32 %v463, %v464
    %v466 = vrot.slane %v465, 1
    %v467 = vadd.f32 %v465, %v466
    %v468 = vlaneseq
    %v469 = vshrl.u32 %v468, 7
    %vm470 = vcmp.eq.s32.totalorder %v469, 0
    %vm471 = vcmp.eq.s32.totalorder %v469, 1
    %v472 = vsel %vm471, %v467, 0.0
    %v473 = vsel %vm470, %v461, %v472
    %474 = vst [vmem:[#allocation6] sm:$0xff] %v473
    // Predicated region
    $region26: #{tpu_custom_call.1} parent=1 // pred_check
      _
    $region27: #{tpu_custom_call.1} parent=1 // pred_check_branch
      %476 = sbr.rel (0) target = $region29
    $region28: #{tpu_custom_call.1} parent=1 // pred_region
      %s478 = ssub.s32 128, 128
      %479 = vsyncadd [#allocation4], %s478
      %s481 = sshll.u32 [#allocation5], 4
      %s482 = int_to_ptr.vmem [resolvable:$true] %s481
      %484 = dma.vmem_to_hbm [thread:$0]  %s482, 128, %s5, [#allocation4]
    $region29: #{tpu_custom_call.1} parent=1 // pred_fallthru
      _
    // Predicated region
    $region30: #{tpu_custom_call.1} parent=1 // pred_check
      _
    $region31: #{tpu_custom_call.1} parent=1 // pred_check_branch
      %486 = sbr.rel (0) target = $region33
    $region32: #{tpu_custom_call.1} parent=1 // pred_region
      %s488 = ssub.s32 128, 128
      %489 = vsyncadd [#allocation7], %s488
      %s491 = sshll.u32 [#allocation6], 4
      %s492 = int_to_ptr.vmem [resolvable:$true] %s491
      %494 = dma.vmem_to_hbm [thread:$0]  %s492, 128, %s6, [#allocation7]
    $region33: #{tpu_custom_call.1} parent=1 // pred_fallthru
      _
    // Predicated region
    $region34: #{tpu_custom_call.1} parent=1 // pred_check
      _
    $region35: #{tpu_custom_call.1} parent=1 // pred_check_branch
      %496 = sbr.rel (0) target = $region37
    $region36: #{tpu_custom_call.1} parent=1 // pred_region
      %497 = dma.done [#allocation4], 128
    $region37: #{tpu_custom_call.1} parent=1 // pred_fallthru
      _
    // Predicated region
    $region38: #{tpu_custom_call.1} parent=1 // pred_check
      _
    $region39: #{tpu_custom_call.1} parent=1 // pred_check_branch
      %499 = sbr.rel (0) target = $region41
    $region40: #{tpu_custom_call.1} parent=1 // pred_region
      %500 = dma.done [#allocation7], 128
    $region41: #{tpu_custom_call.1} parent=1 // pred_fallthru
      _
    %501 = vsyncpa [#allocation3], 1
    %502 = vsyncpa [#allocation4], 1
    %503 = vsyncpa [#allocation7], 1

</llo_original>
